<compile_context>
chip_gen: v5e
topology: v5e:2x2
jax: 0.10.0
libtpu: 0.0.40
codegen_flags: <defaults>
</compile_context>

<pallas_src>
import functools

import jax
import jax.numpy as jnp
from jax import lax
from jax.experimental import pallas as pl
from jax.experimental.pallas import tpu as pltpu

SMOOTH = 1.0
_LANES = 128
_SUB_ROWS = 1024           # rows per fused inner-loop chunk (512 KiB of f32)
_MAX_BLOCK_ROWS = 8192     # (8192, 128) f32 tile = 4 MiB per input per pipeline buffer
_VMEM_LIMIT_BYTES = 40 * 1024 * 1024


def _round_up(x, m):
    return ((x + m - 1) // m) * m


def _dice_partial_kernel(pred_ref, mask_ref, out_ref, *,
                         block_rows, sub_rows, full_rows, rem,
                         num_blocks, needs_mask):
    """pred_ref/mask_ref: (block_rows, 128) tiles; out_ref: (1, 2, 8, 128) partial sums."""
    num_sub = block_rows // sub_rows
    b = pl.program_id(0)
    row_base = b * block_rows

    def accumulate(apply_tail_mask):
        # Fused streaming reduction: never materialize a (block_rows, 128)
        # intermediate; accumulate straight into two (8, 128) f32 vreg tiles.
        def body(i, carry):
            acc_i, acc_u = carry
            r0 = pl.multiple_of(i * sub_rows, sub_rows)
            p_raw = pred_ref[pl.ds(r0, sub_rows), :].astype(jnp.float32)
            m = mask_ref[pl.ds(r0, sub_rows), :].astype(jnp.float32)
            # Exact sigmoid via a single EUP op: sigmoid(x) = 0.5*(tanh(x/2)+1).
            p = 0.5 * (jnp.tanh(0.5 * p_raw) + 1.0)
            if apply_tail_mask:
                # Out-of-bounds rows of a ragged last block contain unspecified
                # data; pad lanes of the last row are zeros.  Mask both exactly.
                abs_row = (row_base + r0) + lax.broadcasted_iota(
                    jnp.int32, (sub_rows, _LANES), 0)
                if rem == 0:
                    valid = abs_row < full_rows
                else:
                    lane = lax.broadcasted_iota(
                        jnp.int32, (sub_rows, _LANES), 1)
                    valid = (abs_row < full_rows) | (
                        (abs_row == full_rows) & (lane < rem))
                # where() (not multiply) so NaN garbage in OOB rows cannot leak.
                p = jnp.where(valid, p, 0.0)
                m = jnp.where(valid, m, 0.0)
            inter = p * m          # contributes to sum(sigmoid(pred) * mask)
            union = p + m          # contributes to sum(sigmoid(pred)) + sum(mask)
            acc_i = acc_i + jnp.sum(
                inter.reshape(sub_rows // 8, 8, _LANES), axis=0)
            acc_u = acc_u + jnp.sum(
                union.reshape(sub_rows // 8, 8, _LANES), axis=0)
            return acc_i, acc_u

        init = (jnp.zeros((8, _LANES), jnp.float32),
                jnp.zeros((8, _LANES), jnp.float32))
        return lax.fori_loop(0, num_sub, body, init, unroll=True)

    def write(acc):
        acc_i, acc_u = acc
        out_ref[0, 0, :, :] = acc_i
        out_ref[0, 1, :, :] = acc_u

    if needs_mask and num_blocks > 1:
        # Only the last grid block touches the ragged tail; every other block
        # runs the cheap mask-free path.
        @pl.when(b == num_blocks - 1)
        def _():
            write(accumulate(True))

        @pl.when(b < num_blocks - 1)
        def _():
            write(accumulate(False))
    elif needs_mask:
        write(accumulate(True))
    else:
        write(accumulate(False))


def dice_loss(pred, mask, smooth=SMOOTH):
    """pred, mask: same shape (e.g. [B, 1, H, W]) -> scalar f32 dice loss.

    pred may be f32/bf16; mask may be f32/bf16/int8/bool (exact for 0/1 labels).
    """
    assert pred.shape == mask.shape, "pred and mask should have the same shape."

    n = pred.size
    full_rows = n // _LANES
    rem = n % _LANES
    rows = full_rows + (1 if rem else 0)       # rows of the lane-dense [rows, 128] view

    pred_flat = pred.reshape(-1)
    mask_flat = mask.reshape(-1)
    if rem:
        # Minimal pad (< 128 elements) only when n is not lane-aligned; the
        # padded lanes are excluded exactly by the in-kernel tail mask.
        lane_pad = _LANES - rem
        pred_flat = jnp.pad(pred_flat, (0, lane_pad))
        mask_flat = jnp.pad(mask_flat, (0, lane_pad))
    pred2 = pred_flat.reshape(rows, _LANES)
    mask2 = mask_flat.reshape(rows, _LANES)

    # Block sizing: big blocks amortize per-grid-step overhead, but keep several
    # grid steps for megacore sharding on large inputs.  Rows are a multiple of
    # 32 so int8/bool masks and bf16 preds tile cleanly.
    block_rows = min(_MAX_BLOCK_ROWS, _round_up(pl.cdiv(rows, 4), 32))
    if block_rows > _SUB_ROWS:
        block_rows = _round_up(block_rows, _SUB_ROWS)
    sub_rows = min(_SUB_ROWS, block_rows)
    num_blocks = pl.cdiv(rows, block_rows)
    needs_mask = (num_blocks * block_rows != rows) or (rem != 0)

    kernel = functools.partial(
        _dice_partial_kernel,
        block_rows=block_rows, sub_rows=sub_rows, full_rows=full_rows,
        rem=rem, num_blocks=num_blocks, needs_mask=needs_mask)

    partials = pl.pallas_call(
        kernel,
        out_shape=jax.ShapeDtypeStruct((num_blocks, 2, 8, _LANES), jnp.float32),
        grid_spec=pltpu.PrefetchScalarGridSpec(
            num_scalar_prefetch=0,
            grid=(num_blocks,),
            in_specs=[
                pl.BlockSpec((block_rows, _LANES), lambda b: (b, 0)),
                pl.BlockSpec((block_rows, _LANES), lambda b: (b, 0)),
            ],
            out_specs=pl.BlockSpec((1, 2, 8, _LANES), lambda b: (b, 0, 0, 0)),
        ),
        compiler_params=pltpu.CompilerParams(
            dimension_semantics=("parallel",),
            vmem_limit_bytes=_VMEM_LIMIT_BYTES,
        ),
    )(pred2, mask2)

    sums = jnp.sum(partials, axis=(0, 2, 3))   # (2,): tiny final reduce in XLA
    intersection = sums[0]
    union = sums[1]
    dice = (2.0 * intersection + smooth) / (union + smooth)
    return 1.0 - dice


def _dice_loss_ref(pred, mask, smooth=SMOOTH):
    """Pure-JAX reference matching the PyTorch DiceLoss module exactly."""
    p = jax.nn.sigmoid(pred.astype(jnp.float32))
    m = mask.astype(jnp.float32)
    intersection = jnp.sum(p * m)
    union = jnp.sum(p) + jnp.sum(m)
    return 1.0 - (2.0 * intersection + smooth) / (union + smooth)


def _check(pred, mask, rtol=1e-4, atol=1e-6):
    out = jax.block_until_ready(dice_loss(pred, mask))
    ref = jax.block_until_ready(_dice_loss_ref(pred, mask))
    assert jnp.allclose(out, ref, rtol=rtol, atol=atol), (pred.shape, out, ref)


if __name__ == "__main__":
    key = jax.random.PRNGKey(0)

    def make(shape, k):
        k1, k2 = jax.random.split(k)
        pred = jax.random.normal(k1, shape, dtype=jnp.float32)
        mask = (jax.random.uniform(k2, shape) > 0.5).astype(jnp.float32)
        return pred, mask

    keys = jax.random.split(key, 5)

    # 1) Module's documented shape: tiny, single ragged block (row-tail mask).
    pred, mask = make((2, 1, 16, 16), keys[0])
    _check(pred, mask)

    # 2) n not a multiple of 128: lane-tail mask + row-tail mask.
    pred, mask = make((1, 1, 50, 37), keys[1])
    _check(pred, mask)

    # 3) Multi-block grid with a ragged last block (pl.when masked/unmasked split).
    pred, mask = make((2, 1, 96, 96), keys[2])
    _check(pred, mask)

    # 4) Narrow input dtypes (bf16 pred, int8 mask) — kernel upcasts internally.
    pred, mask = make((2, 1, 64, 64), keys[3])
    _check(pred.astype(jnp.bfloat16), mask.astype(jnp.int8))

    # 5) Larger aligned input: 4 parallel blocks, fused inner loop with 2 sub-chunks.
    pred, mask = make((4, 1, 512, 512), keys[4])
    _check(pred, mask)

    print("KERNEL_OK")
</pallas_src>

<mosaic_0001>
module attributes {stable_mosaic.version = 11 : i64} {
  func.func @_dice_partial_kernel(%arg0: i32, %arg1: memref<32x128xf32, #tpu.memory_space<vmem>>, %arg2: memref<32x128xf32, #tpu.memory_space<vmem>>, %arg3: memref<1x2x8x128xf32, #tpu.memory_space<vmem>>) attributes {dimension_semantics = [#tpu.dimension_semantics<parallel>], iteration_bounds = array<i64: 1>, scalar_prefetch = 0 : i64, scratch_operands = 0 : i64, tpu.core_type = #tpu.core_type<tc>, window_params = [{transform_indices = @transform_0, window_bounds = array<i64: 32, 128>}, {transform_indices = @transform_1, window_bounds = array<i64: 32, 128>}, {transform_indices = @transform_2, window_bounds = array<i64: 1, 2, 8, 128>}]} {
    %c32_i32 = arith.constant 32 : i32
    %0 = arith.muli %arg0, %c32_i32 : i32
    %cst = arith.constant 0.000000e+00 : f32
    %1 = vector.broadcast %cst : f32 to vector<8x128xf32>
    %cst_0 = arith.constant 0.000000e+00 : f32
    %2 = vector.broadcast %cst_0 : f32 to vector<8x128xf32>
    %c0_i32 = arith.constant 0 : i32
    %c32_i32_1 = arith.constant 32 : i32
    %3 = arith.muli %c0_i32, %c32_i32_1 : i32
    %4 = tpu.assume_multiple %3, 32 : i32
    %5 = arith.index_cast %4 : i32 to index
    %c0 = arith.constant 0 : index
    %6 = vector.load %arg1[%5, %c0] : memref<32x128xf32, #tpu.memory_space<vmem>>, vector<32x128xf32>
    %7 = arith.index_cast %4 : i32 to index
    %c0_2 = arith.constant 0 : index
    %8 = vector.load %arg2[%7, %c0_2] : memref<32x128xf32, #tpu.memory_space<vmem>>, vector<32x128xf32>
    %cst_3 = arith.constant 5.000000e-01 : f32
    %9 = vector.broadcast %cst_3 : f32 to vector<32x128xf32>
    %10 = arith.mulf %9, %6 : vector<32x128xf32>
    %11 = math.tanh %10 : vector<32x128xf32>
    %cst_4 = arith.constant 1.000000e+00 : f32
    %12 = vector.broadcast %cst_4 : f32 to vector<32x128xf32>
    %13 = arith.addf %11, %12 : vector<32x128xf32>
    %cst_5 = arith.constant 5.000000e-01 : f32
    %14 = vector.broadcast %cst_5 : f32 to vector<32x128xf32>
    %15 = arith.mulf %14, %13 : vector<32x128xf32>
    %16 = arith.addi %0, %4 : i32
    %17 = tpu.iota {dimensions = array<i32: 0>} : vector<32x128xi32>
    %18 = vector.broadcast %16 : i32 to vector<32x128xi32>
    %19 = arith.addi %18, %17 : vector<32x128xi32>
    %c4_i32 = arith.constant 4 : i32
    %20 = vector.broadcast %c4_i32 : i32 to vector<32x128xi32>
    %21 = arith.cmpi slt, %19, %20 : vector<32x128xi32>
    %cst_6 = arith.constant 0.000000e+00 : f32
    %22 = vector.broadcast %cst_6 : f32 to vector<32x128xf32>
    %23 = arith.select %21, %15, %22 : vector<32x128xi1>, vector<32x128xf32>
    %cst_7 = arith.constant 0.000000e+00 : f32
    %24 = vector.broadcast %cst_7 : f32 to vector<32x128xf32>
    %25 = arith.select %21, %8, %24 : vector<32x128xi1>, vector<32x128xf32>
    %26 = arith.mulf %23, %25 : vector<32x128xf32>
    %27 = arith.addf %23, %25 : vector<32x128xf32>
    %28 = vector.shape_cast %26 : vector<32x128xf32> to vector<4x8x128xf32>
    %cst_8 = arith.constant dense<0.000000e+00> : vector<8x128xf32>
    %29 = vector.multi_reduction <add>, %28, %cst_8 [0] : vector<4x8x128xf32> to vector<8x128xf32>
    %30 = arith.addf %1, %29 : vector<8x128xf32>
    %31 = vector.shape_cast %27 : vector<32x128xf32> to vector<4x8x128xf32>
    %cst_9 = arith.constant dense<0.000000e+00> : vector<8x128xf32>
    %32 = vector.multi_reduction <add>, %31, %cst_9 [0] : vector<4x8x128xf32> to vector<8x128xf32>
    %33 = arith.addf %2, %32 : vector<8x128xf32>
    %c1_i32 = arith.constant 1 : i32
    %c0_10 = arith.constant 0 : index
    %c0_11 = arith.constant 0 : index
    %c0_12 = arith.constant 0 : index
    %c0_13 = arith.constant 0 : index
    %34 = vector.load %arg3[%c0_10, %c0_11, %c0_12, %c0_13] : memref<1x2x8x128xf32, #tpu.memory_space<vmem>>, vector<1x1x8x128xf32>
    %35 = vector.shape_cast %34 : vector<1x1x8x128xf32> to vector<8x128xf32>
    %36 = vector.shape_cast %30 : vector<8x128xf32> to vector<1x1x8x128xf32>
    tpu.vector_store %arg3[%c0_10, %c0_11, %c0_12, %c0_13], %36 {strides = array<i32>} : memref<1x2x8x128xf32, #tpu.memory_space<vmem>>, vector<1x1x8x128xf32>,
    %c0_14 = arith.constant 0 : index
    %c1 = arith.constant 1 : index
    %c0_15 = arith.constant 0 : index
    %c0_16 = arith.constant 0 : index
    %37 = vector.load %arg3[%c0_14, %c1, %c0_15, %c0_16] : memref<1x2x8x128xf32, #tpu.memory_space<vmem>>, vector<1x1x8x128xf32>
    %38 = vector.shape_cast %37 : vector<1x1x8x128xf32> to vector<8x128xf32>
    %39 = vector.shape_cast %33 : vector<8x128xf32> to vector<1x1x8x128xf32>
    tpu.vector_store %arg3[%c0_14, %c1, %c0_15, %c0_16], %39 {strides = array<i32>} : memref<1x2x8x128xf32, #tpu.memory_space<vmem>>, vector<1x1x8x128xf32>,
    return
  }
  func.func @transform_0(%arg0: i32) -> (i32, i32) {
    %c0_i32 = arith.constant 0 : i32
    %c0_i32_0 = arith.constant 0 : i32
    return %arg0, %c0_i32 : i32, i32
  }
  func.func @transform_1(%arg0: i32) -> (i32, i32) {
    %c0_i32 = arith.constant 0 : i32
    %c0_i32_0 = arith.constant 0 : i32
    return %arg0, %c0_i32 : i32, i32
  }
  func.func @transform_2(%arg0: i32) -> (i32, i32, i32, i32) {
    %c0_i32 = arith.constant 0 : i32
    %c0_i32_0 = arith.constant 0 : i32
    %c0_i32_1 = arith.constant 0 : i32
    %c0_i32_2 = arith.constant 0 : i32
    return %arg0, %c0_i32, %c0_i32_0, %c0_i32_1 : i32, i32, i32, i32
  }
}

</mosaic_0001>

<llo_original>
// kernel: tpu_custom_call.1
$region0: #{tpu_custom_call.1}
  #allocation0 [shape = 'u32[]', space=smem, size = 0x4, offset = 0x4, fixed_abs, tag = 'smem constant byte address 0x4 - core index']
  #allocation1 [shape = 'u32[72,128]{1,0:T(1,128)}', space=vmem, size = 0x9000, scoped, tag = 'internal scratch']
  %s0 = inlined_call_operand.hbm [shape: f32[4,128], index: 0, kind: input, shape index: {}]
  %s1 = inlined_call_operand.hbm [shape: f32[4,128], index: 1, kind: input, shape index: {}]
  %s2 = inlined_call_operand.hbm [shape: f32[1,2,8,128], index: 2, kind: output, shape index: {}]
  %s3 = sld [smem:[#allocation0]]
  $region26: #{tpu_custom_call.1} parent=0
    _
  %s5 = ssub.s32 1, %s3
  %s6 = scalar_select 0, %s5, %s3
  $region1: #{tpu_custom_call.1} parent=0
    #allocation2 [shape = 'u8[16384]{0}', space=vmem, size = 0x4000, scoped, tag = 'input window, operand 0, single buffered']
    #allocation3 [shape = 's32[1]{0}', space=sflag, size = 0x4, scoped, tag = 'scoped memory for tpu_custom_call.1']
    #allocation4 [shape = 's32[1]{0}', space=sflag, size = 0x4, scoped, tag = 'scoped memory for tpu_custom_call.1']
    #allocation5 [shape = 'u8[16384]{0}', space=vmem, size = 0x4000, scoped, tag = 'input window, operand 1, single buffered']
    #allocation6 [shape = 's32[1]{0}', space=sflag, size = 0x4, scoped, tag = 'scoped memory for tpu_custom_call.1']
    #allocation7 [shape = 'u8[8192]{0}', space=vmem, size = 0x2000, scoped, tag = 'output window, operand 0, single buffered']
    %7 = vsyncpa [#allocation3], 0
    %8 = vsyncpa [#allocation6], 0
    %9 = vsyncpa [#allocation4], 0
    // Predicated region
    $region2: #{tpu_custom_call.1} parent=1 // pred_check
      _
    $region3: #{tpu_custom_call.1} parent=1 // pred_check_branch
      %11 = sbr.rel (0) target = $region5
    $region4: #{tpu_custom_call.1} parent=1 // pred_region
      %13 = vsyncadd [#allocation3], 448
      %s14 = sshll.u32 %s0, 4
      %s15 = int_to_ptr.hbm [resolvable:$true] %s14
      %s16 = sshll.u32 [#allocation2], 4
      %s17 = int_to_ptr.vmem [resolvable:$true] %s16
      %22 = dma.hbm_to_vmem [thread:$0]  %s15, 64, %s17, [#allocation3], 64, 64, 4
    $region5: #{tpu_custom_call.1} parent=1 // pred_fallthru
      _
    // Predicated region
    $region6: #{tpu_custom_call.1} parent=1 // pred_check
      _
    $region7: #{tpu_custom_call.1} parent=1 // pred_check_branch
      %24 = sbr.rel (0) target = $region9
    $region8: #{tpu_custom_call.1} parent=1 // pred_region
      %26 = vsyncadd [#allocation6], 448
      %s27 = sshll.u32 %s1, 4
      %s28 = int_to_ptr.hbm [resolvable:$true] %s27
      %s29 = sshll.u32 [#allocation5], 4
      %s30 = int_to_ptr.vmem [resolvable:$true] %s29
      %35 = dma.hbm_to_vmem [thread:$0]  %s28, 64, %s30, [#allocation6], 64, 64, 4
    $region9: #{tpu_custom_call.1} parent=1 // pred_fallthru
      _
    // Predicated region
    $region10: #{tpu_custom_call.1} parent=1 // pred_check
      _
    $region11: #{tpu_custom_call.1} parent=1 // pred_check_branch
      %37 = sbr.rel (0) target = $region13
    $region12: #{tpu_custom_call.1} parent=1 // pred_region
      %39 = dma.done [#allocation3], 512
    $region13: #{tpu_custom_call.1} parent=1 // pred_fallthru
      _
    // Predicated region
    $region14: #{tpu_custom_call.1} parent=1 // pred_check
      _
    $region15: #{tpu_custom_call.1} parent=1 // pred_check_branch
      %41 = sbr.rel (0) target = $region17
    $region16: #{tpu_custom_call.1} parent=1 // pred_region
      %43 = dma.done [#allocation6], 512
    $region17: #{tpu_custom_call.1} parent=1 // pred_fallthru
      _
    %s44 = smul.u32 0, 32
    %v45 = vld [vmem:[#allocation2] sm:$0xff]
    %v46 = vld [vmem:[#allocation2 + $0x8] sm:$0xff]
    %v47 = vld [vmem:[#allocation2 + $0x10] sm:$0xff]
    %v48 = vld [vmem:[#allocation2 + $0x18] sm:$0xff]
    %v49 = vld [vmem:[#allocation5] sm:$0xff]
    %v50 = vld [vmem:[#allocation5 + $0x8] sm:$0xff]
    %v51 = vld [vmem:[#allocation5 + $0x10] sm:$0xff]
    %v52 = vld [vmem:[#allocation5 + $0x18] sm:$0xff]
    %v53 = vmul.f32 %v45, 0.5
    %v54 = vmul.f32 %v46, 0.5
    %v55 = vmul.f32 %v47, 0.5
    %v56 = vmul.f32 %v48, 0.5
    %v57 = vtanh.pop %v53
    %v58 = vtanh.pop %v54
    %v59 = vtanh.pop %v55
    %v60 = vtanh.pop %v56
    %v61 = vadd.f32 %v57, 1.0
    %v62 = vadd.f32 %v58, 1.0
    %v63 = vadd.f32 %v59, 1.0
    %v64 = vadd.f32 %v60, 1.0
    %v65 = vmul.f32 %v61, 0.5
    %v66 = vmul.f32 %v62, 0.5
    %v67 = vmul.f32 %v63, 0.5
    %v68 = vmul.f32 %v64, 0.5
    %s69 = sadd.s32 %s44, 0
    %v70 = vlaneseq
    %v71 = vshrl.u32 %v70, 7
    %v72 = vadd.s32 %v71, 8
    %v73 = vadd.s32 %v71, 16
    %v74 = vadd.s32 %v71, 24
    %v75 = vstv %s69
    %v76 = vadd.s32 %v75, %v71
    %v77 = vadd.s32 %v75, %v72
    %v78 = vadd.s32 %v75, %v73
    %v79 = vadd.s32 %v75, %v74
    %vm80 = vcmp.lt.s32.totalorder %v76, 4
    %vm81 = vcmp.lt.s32.totalorder %v77, 4
    %vm82 = vcmp.lt.s32.totalorder %v78, 4
    %vm83 = vcmp.lt.s32.totalorder %v79, 4
    %v84 = vsel %vm80, %v65, 0.0
    %v85 = vsel %vm81, %v66, 0.0
    %v86 = vsel %vm82, %v67, 0.0
    %v87 = vsel %vm83, %v68, 0.0
    %v88 = vsel %vm80, %v49, 0.0
    %v89 = vsel %vm81, %v50, 0.0
    %v90 = vsel %vm82, %v51, 0.0
    %v91 = vsel %vm83, %v52, 0.0
    %v92 = vmul.f32 %v84, %v88
    %v93 = vmul.f32 %v85, %v89
    %v94 = vmul.f32 %v86, %v90
    %v95 = vmul.f32 %v87, %v91
    %v96 = vadd.f32 %v84, %v88
    %v97 = vadd.f32 %v85, %v89
    %v98 = vadd.f32 %v86, %v90
    %v99 = vadd.f32 %v87, %v91
    %v100 = vadd.f32 %v92, %v93
    %v101 = vadd.f32 %v100, %v94
    %v102 = vadd.f32 %v101, %v95
    %v103 = vadd.f32 %v102, 0.0
    %v104 = vadd.f32 %v96, %v97
    %v105 = vadd.f32 %v104, %v98
    %v106 = vadd.f32 %v105, %v99
    %v107 = vadd.f32 %v106, 0.0
    %108 = vst [vmem:[#allocation7] sm:$0xff] %v103
    %s109 = scalar_lea.vmem [#allocation7], 8
    %110 = vst [vmem:[%s109] sm:$0xff] %v107
    // Predicated region
    $region18: #{tpu_custom_call.1} parent=1 // pred_check
      _
    $region19: #{tpu_custom_call.1} parent=1 // pred_check_branch
      %112 = sbr.rel (0) target = $region21
    $region20: #{tpu_custom_call.1} parent=1 // pred_region
      %114 = vsyncadd [#allocation4], 0
      %s115 = sshll.u32 [#allocation7], 4
      %s116 = int_to_ptr.vmem [resolvable:$true] %s115
      %s117 = sshll.u32 %s2, 4
      %s118 = int_to_ptr.hbm [resolvable:$true] %s117
      %123 = dma.vmem_to_hbm [thread:$0]  %s116, 256, %s118, [#allocation4], 128, 128, 8
    $region21: #{tpu_custom_call.1} parent=1 // pred_fallthru
      _
    // Predicated region
    $region22: #{tpu_custom_call.1} parent=1 // pred_check
      _
    $region23: #{tpu_custom_call.1} parent=1 // pred_check_branch
      %125 = sbr.rel (0) target = $region25
    $region24: #{tpu_custom_call.1} parent=1 // pred_region
      %127 = dma.done [#allocation4], 256
    $region25: #{tpu_custom_call.1} parent=1 // pred_fallthru
      _
    %128 = vsyncpa [#allocation3], 1
    %129 = vsyncpa [#allocation6], 1
    %130 = vsyncpa [#allocation4], 1

</llo_original>
